<compile_context>
chip_gen: v7x
topology: tpu7x:2x2x1
jax: 0.10.0
libtpu: 0.0.40
codegen_flags: <defaults>
</compile_context>

<pallas_src>
import functools

import jax
import jax.numpy as jnp
from jax.experimental import pallas as pl
from jax.experimental.pallas import tpu as pltpu

LN_EPS = 1e-5      # CLIP layer_norm_eps
NEG_INF = -1e30


def _round_up(n, m):
    return ((n + m - 1) // m) * m


def _layernorm_f32(x, g, b):
    m = jnp.mean(x, axis=-1, keepdims=True)
    v = jnp.mean(jnp.square(x - m), axis=-1, keepdims=True)
    return (x - m) * jax.lax.rsqrt(v + LN_EPS) * g + b


# ------------------------------ Pallas kernels -------------------------------


def _patch_embed_kernel(p_ref, w_ref, o_ref):
    # Patch-embedding conv (stride == kernel == patch) as a row-tiled matmul.
    o_ref[...] = jnp.dot(
        p_ref[...], w_ref[...], preferred_element_type=jnp.float32
    ).astype(o_ref.dtype)


def _pos_preln_kernel(emb_ref, pos_ref, g_ref, b_ref, o_ref):
    # Fallback path (only used when select_layer picks hidden_states[0]).
    x = emb_ref[...].astype(jnp.float32) + pos_ref[...]
    o_ref[...] = _layernorm_f32(x, g_ref[...], b_ref[...]).astype(o_ref.dtype)


def _tower_kernel(
    emb_ref, pos_ref, plg_ref, plb_ref,
    ln1g_ref, ln1b_ref, wqkv_ref, bqkv_ref, wo_ref, bo_ref,
    ln2g_ref, ln2b_ref, w1_ref, b1_ref, w2_ref, b2_ref,
    o_ref,
    *, num_heads, head_dim, seq_true, mlp_chunk,
):
    """One grid step = (batch element b, encoder layer l)."""
    l = pl.program_id(1)
    S, D = o_ref.shape
    scale = float(head_dim) ** -0.5

    # ---- layer-0 prologue: pos-embedding add + CLIP pre_layrnorm (fused) ----
    @pl.when(l == 0)
    def _():
        x0 = emb_ref[...].astype(jnp.float32) + pos_ref[...]
        o_ref[...] = _layernorm_f32(
            x0, plg_ref[...], plb_ref[...]).astype(o_ref.dtype)

    # Residual stream: resident in the output block across the l grid axis.
    x = o_ref[...].astype(jnp.float32)

    # ---- LayerNorm 1 + fused QKV (single [D, 3D] matmul, f32 accumulate) ----
    h = _layernorm_f32(x, ln1g_ref[...], ln1b_ref[...]).astype(jnp.bfloat16)
    qkv = jnp.dot(h, wqkv_ref[...], preferred_element_type=jnp.float32)
    qkv = (qkv + bqkv_ref[...]).astype(jnp.bfloat16)   # bf16 right after bias

    # key-padding mask: only when the sequence was actually padded (static).
    if S != seq_true:
        kidx = jax.lax.broadcasted_iota(jnp.int32, (1, S), 1)
        kmask = jnp.where(kidx < seq_true, 0.0, NEG_INF).astype(jnp.float32)

    # ---- multi-head attention: per-head softmax, ONE out-proj matmul --------
    # TODO(synk): at real CLIP sizes (head_dim=64) process head pairs so the
    # QK^T contraction dim is >=128 (demo head_dim=128 already lane-dense).
    ctx_heads = []
    for hh in range(num_heads):
        q_h = qkv[:, hh * head_dim:(hh + 1) * head_dim]
        k_h = qkv[:, D + hh * head_dim: D + (hh + 1) * head_dim]
        v_h = qkv[:, 2 * D + hh * head_dim: 2 * D + (hh + 1) * head_dim]
        s = jax.lax.dot_general(
            q_h, k_h, dimension_numbers=(((1,), (1,)), ((), ())),
            preferred_element_type=jnp.float32,
        ) * scale
        if S != seq_true:
            s = s + kmask
        s = s - jnp.max(s, axis=-1, keepdims=True)       # stable softmax (f32)
        p = jnp.exp(s)
        p = p * pl.reciprocal(jnp.sum(p, axis=-1, keepdims=True), approx=True)
        ctx_heads.append(
            jnp.dot(p.astype(jnp.bfloat16), v_h,
                    preferred_element_type=jnp.float32).astype(jnp.bfloat16))
    ctx = jnp.concatenate(ctx_heads, axis=-1)            # [S, D] bf16
    attn = jnp.dot(ctx, wo_ref[...], preferred_element_type=jnp.float32)
    attn = attn + bo_ref[...]

    x1 = x + attn                                        # residual 1 (f32)

    # ---- LayerNorm 2 + quick-GELU MLP, chunked over the intermediate dim ----
    h2 = _layernorm_f32(x1, ln2g_ref[...], ln2b_ref[...]).astype(jnp.bfloat16)
    inter = w1_ref.shape[1]
    y = jnp.zeros((S, D), jnp.float32)
    for c0 in range(0, inter, mlp_chunk):
        c1 = min(c0 + mlp_chunk, inter)
        f = jnp.dot(h2, w1_ref[:, c0:c1], preferred_element_type=jnp.float32)
        f = (f + b1_ref[:, c0:c1]).astype(jnp.bfloat16)
        f = f * jax.nn.sigmoid(1.702 * f)                # quick_gelu in bf16
        y = y + jnp.dot(f, w2_ref[c0:c1, :], preferred_element_type=jnp.float32)
    y = y + b2_ref[...]

    o_ref[...] = (x1 + y).astype(o_ref.dtype)            # residual 2


# ------------------------------- JAX wrappers --------------------------------


def patch_embed_matmul(patches, w, *, row_tile=512):
    rows, K = patches.shape
    D = w.shape[1]
    tm = min(row_tile, rows)
    if tm % 8 != 0:          # tiny case: one full block (satisfies (8,128) rule)
        tm = rows
    return pl.pallas_call(
        _patch_embed_kernel,
        out_shape=jax.ShapeDtypeStruct((rows, D), jnp.bfloat16),
        grid=(pl.cdiv(rows, tm),),
        in_specs=[
            pl.BlockSpec((tm, K), lambda i: (i, 0)),
            pl.BlockSpec((K, D), lambda i: (0, 0)),
        ],
        out_specs=pl.BlockSpec((tm, D), lambda i: (i, 0)),
        compiler_params=pltpu.CompilerParams(
            dimension_semantics=("parallel",),
            vmem_limit_bytes=32 * 1024 * 1024,
        ),
    )(patches, w)


def pos_add_pre_layernorm(emb, pos, g, b):
    B, S, D = emb.shape
    return pl.pallas_call(
        _pos_preln_kernel,
        out_shape=jax.ShapeDtypeStruct((B, S, D), jnp.bfloat16),
        grid=(B,),
        in_specs=[
            pl.BlockSpec((None, S, D), lambda bi: (bi, 0, 0)),
            pl.BlockSpec((S, D), lambda bi: (0, 0)),
            pl.BlockSpec((1, D), lambda bi: (0, 0)),
            pl.BlockSpec((1, D), lambda bi: (0, 0)),
        ],
        out_specs=pl.BlockSpec((None, S, D), lambda bi: (bi, 0, 0)),
        compiler_params=pltpu.CompilerParams(
            dimension_semantics=("parallel",),
            vmem_limit_bytes=32 * 1024 * 1024,
        ),
    )(emb, pos, g, b)


def clip_encoder_stack(emb, pos_padded, params, *, num_layers_to_run,
                       num_heads, seq_true, mlp_chunk=2048, vmem_limit_mb=48):
    """All encoder layers in one pallas_call; grid = (batch, layer)."""
    B, S, D = emb.shape
    L = num_layers_to_run
    inter = params["w1"].shape[-1]
    hd = D // num_heads

    kernel = functools.partial(
        _tower_kernel, num_heads=num_heads, head_dim=hd,
        seq_true=seq_true, mlp_chunk=min(mlp_chunk, inter))

    def wspec(shape):
        # Per-layer weight stacked on a leading L axis: its block index changes
        # with the inner ("arbitrary") layer axis, so layer l+1 weights are
        # DMA-prefetched under layer l compute.
        return pl.BlockSpec((None,) + shape,
                            lambda b, l: (l,) + (0,) * len(shape))

    def cspec(shape):
        # Grid-invariant block: fetched once, stays resident.
        return pl.BlockSpec(shape, lambda b, l: (0,) * len(shape))

    return pl.pallas_call(
        kernel,
        out_shape=jax.ShapeDtypeStruct((B, S, D), jnp.bfloat16),
        grid=(B, L),
        in_specs=[
            pl.BlockSpec((None, S, D), lambda b, l: (b, 0, 0)),   # embeddings
            cspec((S, D)),                                        # pos embed
            cspec((1, D)), cspec((1, D)),                         # pre_layrnorm
            wspec((1, D)), wspec((1, D)),                         # ln1
            wspec((D, 3 * D)), wspec((1, 3 * D)),                 # fused QKV
            wspec((D, D)), wspec((1, D)),                         # out proj
            wspec((1, D)), wspec((1, D)),                         # ln2
            wspec((D, inter)), wspec((1, inter)),                 # fc1
            wspec((inter, D)), wspec((1, D)),                     # fc2
        ],
        out_specs=pl.BlockSpec((None, S, D), lambda b, l: (b, 0, 0)),
        compiler_params=pltpu.CompilerParams(
            dimension_semantics=("parallel", "arbitrary"),
            # ~48 MiB: within v7x's 64 MiB per-TC VMEM with headroom; raise on
            # v5e/v6e (128 MiB physical) for CLIP-L sized weights if needed.
            vmem_limit_bytes=vmem_limit_mb * 1024 * 1024,
        ),
    )(emb, pos_padded, params["pre_ln_g"], params["pre_ln_b"],
      params["ln1_g"][:L], params["ln1_b"][:L],
      params["w_qkv"][:L], params["b_qkv"][:L],
      params["wo"][:L], params["bo"][:L],
      params["ln2_g"][:L], params["ln2_b"][:L],
      params["w1"][:L], params["b1"][:L],
      params["w2"][:L], params["b2"][:L])


def clip_embeddings(images, params, cfg):
    B, C, H, W = images.shape
    ps = cfg["patch_size"]
    Hp, Wp = H // ps, W // ps
    D = cfg["hidden_size"]
    # Unfold NCHW into a patch matrix; (c, kh, kw) flatten order matches a
    # PyTorch conv weight [D, C, p, p] flattened over its last 3 dims.
    patches = (
        images.reshape(B, C, Hp, ps, Wp, ps)
        .transpose(0, 2, 4, 1, 3, 5)
        .reshape(B * Hp * Wp, C * ps * ps)
    ).astype(jnp.bfloat16)
    pe = patch_embed_matmul(patches, params["patch_w"]).reshape(B, Hp * Wp, D)

    seq_true = Hp * Wp + 1                       # + CLS token
    seq_pad = _round_up(seq_true, 128 if seq_true >= 128 else 8)
    cls = jnp.broadcast_to(params["cls"].astype(jnp.bfloat16), (B, 1, D))
    parts = [cls, pe]
    if seq_pad != seq_true:
        parts.append(jnp.zeros((B, seq_pad - seq_true, D), jnp.bfloat16))
    emb = jnp.concatenate(parts, axis=1)         # [B, seq_pad, D]
    return emb, seq_true


def clip_vision_tower_forward(images, params, cfg):
    """Replicates CLIPVisionTower.forward for a batched tensor input."""
    # TODO(synk): F.interpolate bilinear resize for non-config image sizes is
    # not implemented; inputs must already be at cfg["image_size"].
    emb, seq_true = clip_embeddings(images, params, cfg)
    B, S, D = emb.shape

    pos = params["pos"]                                   # [seq_true, D] f32
    pos_padded = jnp.pad(pos, ((0, S - pos.shape[0]), (0, 0)))

    # HF encoder hidden_states = (post-pre-LN, after L0, after L1, ...); only
    # the selected entry is needed, so run exactly that many layers.
    L = cfg["num_layers"]
    sel = cfg["select_layer"]
    idx = sel if sel >= 0 else (L + 1 + sel)
    if idx == 0:
        h = pos_add_pre_layernorm(emb, pos_padded,
                                  params["pre_ln_g"], params["pre_ln_b"])
    else:
        h = clip_encoder_stack(emb, pos_padded, params,
                               num_layers_to_run=idx,
                               num_heads=cfg["num_heads"], seq_true=seq_true)

    feats = h[:, :seq_true]                               # drop padded rows
    if cfg["select_feature"] == "patch":
        feats = feats[:, 1:]                              # drop CLS token
    elif cfg["select_feature"] == "cls_patch":
        pass
    else:
        raise ValueError(f"Unexpected select feature: {cfg['select_feature']}")
    return feats.astype(images.dtype)


# ------------------------------ Parameter init -------------------------------


def init_params(key, cfg):
    D = cfg["hidden_size"]
    C = cfg["num_channels"]
    ps = cfg["patch_size"]
    inter = cfg["intermediate_size"]
    L = cfg["num_layers"]
    P = (cfg["image_size"] // ps) ** 2
    ks = jax.random.split(key, 7)

    def nrm(k, shape, s=0.02):
        return jax.random.normal(k, shape, jnp.float32) * s

    return {
        # conv weight flattened & transposed; bf16 for MXU-native matmuls.
        "patch_w": nrm(ks[0], (C * ps * ps, D)).astype(jnp.bfloat16),
        "cls": nrm(ks[1], (1, 1, D)),
        "pos": nrm(ks[2], (P + 1, D)),
        "pre_ln_g": jnp.ones((1, D), jnp.float32),
        "pre_ln_b": jnp.zeros((1, D), jnp.float32),
        # Per-layer weights stacked on a leading L axis (streamed by the grid).
        "ln1_g": jnp.ones((L, 1, D), jnp.float32),
        "ln1_b": jnp.zeros((L, 1, D), jnp.float32),
        # From a PyTorch checkpoint: w_qkv[l] = concat([Wq.T, Wk.T, Wv.T], 1).
        "w_qkv": nrm(ks[3], (L, D, 3 * D)).astype(jnp.bfloat16),
        "b_qkv": jnp.zeros((L, 1, 3 * D), jnp.float32),
        "wo": nrm(ks[4], (L, D, D)).astype(jnp.bfloat16),
        "bo": jnp.zeros((L, 1, D), jnp.float32),
        "ln2_g": jnp.ones((L, 1, D), jnp.float32),
        "ln2_b": jnp.zeros((L, 1, D), jnp.float32),
        "w1": nrm(ks[5], (L, D, inter)).astype(jnp.bfloat16),
        "b1": jnp.zeros((L, 1, inter), jnp.float32),
        "w2": nrm(ks[6], (L, inter, D)).astype(jnp.bfloat16),
        "b2": jnp.zeros((L, 1, D), jnp.float32),
    }


# ----------------------------------- main ------------------------------------

if __name__ == "__main__":
    cfg = dict(
        image_size=32,
        patch_size=16,
        num_channels=3,
        hidden_size=256,
        num_heads=2,            # head_dim = 128 -> lane-dense attention tiles
        intermediate_size=1024,
        num_layers=3,
        select_layer=-2,        # mm_vision_select_layer
        select_feature="patch", # mm_vision_select_feature
    )
    key = jax.random.PRNGKey(0)
    pkey, xkey = jax.random.split(key)
    params = init_params(pkey, cfg)

    images = jax.random.normal(
        xkey,
        (2, cfg["num_channels"], cfg["image_size"], cfg["image_size"]),
        jnp.float32,
    )  # NCHW, like the PyTorch module

    feats = clip_vision_tower_forward(images, params, cfg)
    feats = jax.block_until_ready(feats)

    num_patches = (cfg["image_size"] // cfg["patch_size"]) ** 2
    assert feats.shape == (2, num_patches, cfg["hidden_size"]), feats.shape
    assert feats.dtype == images.dtype
    print("KERNEL_OK")
</pallas_src>

<mosaic_0001>
module attributes {stable_mosaic.version = 11 : i64} {
  func.func @_patch_embed_kernel(%arg0: i32, %arg1: memref<8x768xbf16, #tpu.memory_space<vmem>>, %arg2: memref<768x256xbf16, #tpu.memory_space<vmem>>, %arg3: memref<8x256xbf16, #tpu.memory_space<vmem>>) attributes {dimension_semantics = [#tpu.dimension_semantics<parallel>], iteration_bounds = array<i64: 1>, scalar_prefetch = 0 : i64, scratch_operands = 0 : i64, tpu.core_type = #tpu.core_type<tc>, window_params = [{transform_indices = @transform_0, window_bounds = array<i64: 8, 768>}, {pipeline_mode = #tpu.pipeline_mode<synchronous>, transform_indices = @transform_1, window_bounds = array<i64: 768, 256>}, {transform_indices = @transform_2, window_bounds = array<i64: 8, 256>}]} {
    %c0 = arith.constant 0 : index
    %c0_0 = arith.constant 0 : index
    %0 = vector.load %arg1[%c0, %c0_0] : memref<8x768xbf16, #tpu.memory_space<vmem>>, vector<8x768xbf16>
    %c0_1 = arith.constant 0 : index
    %c0_2 = arith.constant 0 : index
    %1 = vector.load %arg2[%c0_1, %c0_2] : memref<768x256xbf16, #tpu.memory_space<vmem>>, vector<768x256xbf16>
    %cst = arith.constant dense<0.000000e+00> : vector<8x256xf32>
    %2 = tpu.matmul %0, %1, %cst {dimension_numbers = #tpu.dot_dimension_numbers<[1], [0], [0], [1], [0, 0, 1, 1], [], []>} : vector<8x768xbf16>, vector<768x256xbf16>, vector<8x256xf32> -> vector<8x256xf32>
    %3 = arith.truncf %2 : vector<8x256xf32> to vector<8x256xbf16>
    %c0_3 = arith.constant 0 : index
    %c0_4 = arith.constant 0 : index
    %4 = vector.load %arg3[%c0_3, %c0_4] : memref<8x256xbf16, #tpu.memory_space<vmem>>, vector<8x256xbf16>
    tpu.vector_store %arg3[%c0_3, %c0_4], %3 {strides = array<i32>} : memref<8x256xbf16, #tpu.memory_space<vmem>>, vector<8x256xbf16>,
    return
  }
  func.func @transform_0(%arg0: i32) -> (i32, i32) {
    %c0_i32 = arith.constant 0 : i32
    %c0_i32_0 = arith.constant 0 : i32
    return %arg0, %c0_i32 : i32, i32
  }
  func.func @transform_1(%arg0: i32) -> (i32, i32) {
    %c0_i32 = arith.constant 0 : i32
    %c0_i32_0 = arith.constant 0 : i32
    %c0_i32_1 = arith.constant 0 : i32
    return %c0_i32, %c0_i32_0 : i32, i32
  }
  func.func @transform_2(%arg0: i32) -> (i32, i32) {
    %c0_i32 = arith.constant 0 : i32
    %c0_i32_0 = arith.constant 0 : i32
    return %arg0, %c0_i32 : i32, i32
  }
}

</mosaic_0001>

<llo_original>
// kernel: tpu_custom_call.1
$region0: #{tpu_custom_call.1}
  #allocation0 [shape = 'u32[]', space=smem, size = 0x4, offset = 0x4, fixed_abs, tag = 'smem constant byte address 0x4 - core index']
  #allocation1 [shape = 'u32[144,128]{1,0:T(1,128)}', space=vmem, size = 0x12000, scoped, tag = 'internal scratch']
  %s0 = inlined_call_operand.hbm [shape: bf16[8,768], index: 0, kind: input, shape index: {}]
  %s1 = inlined_call_operand.hbm [shape: bf16[768,256], index: 1, kind: input, shape index: {}]
  %s2 = inlined_call_operand.hbm [shape: bf16[8,256], index: 2, kind: output, shape index: {}]
  %s3 = sld [smem:[#allocation0]]
  $region26: #{tpu_custom_call.1} parent=0
    _
  %s5 = ssub.s32 1, %s3
  %s6 = scalar_select 0, %s5, %s3
  $region1: #{tpu_custom_call.1} parent=0
    #allocation2 [shape = 'u8[12288]{0}', space=vmem, size = 0x3000, scoped, tag = 'input window, operand 0, single buffered']
    #allocation3 [shape = 's32[1]{0}', space=sflag, size = 0x4, scoped, tag = 'scoped memory for tpu_custom_call.1']
    #allocation4 [shape = 's32[1]{0}', space=sflag, size = 0x4, scoped, tag = 'scoped memory for tpu_custom_call.1']
    #allocation5 [shape = 'u8[393216]{0}', space=vmem, size = 0x60000, scoped, tag = 'input window, operand 1, single buffered']
    #allocation6 [shape = 's32[1]{0}', space=sflag, size = 0x4, scoped, tag = 'scoped memory for tpu_custom_call.1']
    #allocation7 [shape = 'u8[4096]{0}', space=vmem, size = 0x1000, scoped, tag = 'output window, operand 0, single buffered']
    %7 = vsyncpa [#allocation3], 0
    %8 = vsyncpa [#allocation6], 0
    %9 = vsyncpa [#allocation4], 0
    // Predicated region
    $region2: #{tpu_custom_call.1} parent=1 // pred_check
      _
    $region3: #{tpu_custom_call.1} parent=1 // pred_check_branch
      %11 = sbr.rel (0) target = $region5
    $region4: #{tpu_custom_call.1} parent=1 // pred_region
      %s13 = ssub.s32 384, 384
      %14 = vsyncadd [#allocation3], %s13
      %s16 = sshll.u32 [#allocation2], 4
      %s17 = int_to_ptr.vmem [resolvable:$true] %s16
      %19 = dma.hbm_to_vmem [thread:$0]  %s0, 384, %s17, [#allocation3]
    $region5: #{tpu_custom_call.1} parent=1 // pred_fallthru
      _
    // Predicated region
    $region6: #{tpu_custom_call.1} parent=1 // pred_check
      _
    $region7: #{tpu_custom_call.1} parent=1 // pred_check_branch
      %21 = sbr.rel (0) target = $region9
    $region8: #{tpu_custom_call.1} parent=1 // pred_region
      %s23 = ssub.s32 12288, 12288
      %24 = vsyncadd [#allocation6], %s23
      %s25 = sshll.u32 [#allocation5], 4
      %s26 = int_to_ptr.vmem [resolvable:$true] %s25
      %31 = dma.hbm_to_vmem [thread:$0]  %s1, 12288, %s26, [#allocation6], 128, 128, 8
    $region9: #{tpu_custom_call.1} parent=1 // pred_fallthru
      _
    // Predicated region
    $region10: #{tpu_custom_call.1} parent=1 // pred_check
      _
    $region11: #{tpu_custom_call.1} parent=1 // pred_check_branch
      %33 = sbr.rel (0) target = $region13
    $region12: #{tpu_custom_call.1} parent=1 // pred_region
      %34 = dma.done [#allocation3], 384
    $region13: #{tpu_custom_call.1} parent=1 // pred_fallthru
      _
    // Predicated region
    $region14: #{tpu_custom_call.1} parent=1 // pred_check
      _
    $region15: #{tpu_custom_call.1} parent=1 // pred_check_branch
      %36 = sbr.rel (0) target = $region17
    $region16: #{tpu_custom_call.1} parent=1 // pred_region
      %37 = dma.done [#allocation6], 12288
    $region17: #{tpu_custom_call.1} parent=1 // pred_fallthru
      _
    %v38 = vld [vmem:[#allocation2] sm:$0xff]
    %v39 = vld [vmem:[#allocation2 + $0x8] sm:$0xff]
    %v40 = vld [vmem:[#allocation2 + $0x10] sm:$0xff]
    %v41 = vld [vmem:[#allocation5] sm:$0xff]
    %v42 = vld [vmem:[#allocation5 + $0x8] sm:$0xff]
    %v43 = vld [vmem:[#allocation5 + $0x10] sm:$0xff]
    %v44 = vld [vmem:[#allocation5 + $0x18] sm:$0xff]
    %v45 = vld [vmem:[#allocation5 + $0x20] sm:$0xff]
    %v46 = vld [vmem:[#allocation5 + $0x28] sm:$0xff]
    %v47 = vld [vmem:[#allocation5 + $0x30] sm:$0xff]
    %v48 = vld [vmem:[#allocation5 + $0x38] sm:$0xff]
    %v49 = vld [vmem:[#allocation5 + $0x40] sm:$0xff]
    %v50 = vld [vmem:[#allocation5 + $0x48] sm:$0xff]
    %v51 = vld [vmem:[#allocation5 + $0x50] sm:$0xff]
    %v52 = vld [vmem:[#allocation5 + $0x58] sm:$0xff]
    %v53 = vld [vmem:[#allocation5 + $0x60] sm:$0xff]
    %v54 = vld [vmem:[#allocation5 + $0x68] sm:$0xff]
    %v55 = vld [vmem:[#allocation5 + $0x70] sm:$0xff]
    %v56 = vld [vmem:[#allocation5 + $0x78] sm:$0xff]
    %v57 = vld [vmem:[#allocation5 + $0x80] sm:$0xff]
    %v58 = vld [vmem:[#allocation5 + $0x88] sm:$0xff]
    %v59 = vld [vmem:[#allocation5 + $0x90] sm:$0xff]
    %v60 = vld [vmem:[#allocation5 + $0x98] sm:$0xff]
    %v61 = vld [vmem:[#allocation5 + $0xa0] sm:$0xff]
    %v62 = vld [vmem:[#allocation5 + $0xa8] sm:$0xff]
    %v63 = vld [vmem:[#allocation5 + $0xb0] sm:$0xff]
    %v64 = vld [vmem:[#allocation5 + $0xb8] sm:$0xff]
    %v65 = vld [vmem:[#allocation5 + $0xc0] sm:$0xff]
    %v66 = vld [vmem:[#allocation5 + $0xc8] sm:$0xff]
    %v67 = vld [vmem:[#allocation5 + $0xd0] sm:$0xff]
    %v68 = vld [vmem:[#allocation5 + $0xd8] sm:$0xff]
    %v69 = vld [vmem:[#allocation5 + $0xe0] sm:$0xff]
    %v70 = vld [vmem:[#allocation5 + $0xe8] sm:$0xff]
    %v71 = vld [vmem:[#allocation5 + $0xf0] sm:$0xff]
    %v72 = vld [vmem:[#allocation5 + $0xf8] sm:$0xff]
    %v73 = vld [vmem:[#allocation5 + $0x100] sm:$0xff]
    %v74 = vld [vmem:[#allocation5 + $0x108] sm:$0xff]
    %v75 = vld [vmem:[#allocation5 + $0x110] sm:$0xff]
    %v76 = vld [vmem:[#allocation5 + $0x118] sm:$0xff]
    %v77 = vld [vmem:[#allocation5 + $0x120] sm:$0xff]
    %v78 = vld [vmem:[#allocation5 + $0x128] sm:$0xff]
    %v79 = vld [vmem:[#allocation5 + $0x130] sm:$0xff]
    %v80 = vld [vmem:[#allocation5 + $0x138] sm:$0xff]
    %v81 = vld [vmem:[#allocation5 + $0x140] sm:$0xff]
    %v82 = vld [vmem:[#allocation5 + $0x148] sm:$0xff]
    %v83 = vld [vmem:[#allocation5 + $0x150] sm:$0xff]
    %v84 = vld [vmem:[#allocation5 + $0x158] sm:$0xff]
    %v85 = vld [vmem:[#allocation5 + $0x160] sm:$0xff]
    %v86 = vld [vmem:[#allocation5 + $0x168] sm:$0xff]
    %v87 = vld [vmem:[#allocation5 + $0x170] sm:$0xff]
    %v88 = vld [vmem:[#allocation5 + $0x178] sm:$0xff]
    %v89 = vld [vmem:[#allocation5 + $0x180] sm:$0xff]
    %v90 = vld [vmem:[#allocation5 + $0x188] sm:$0xff]
    %v91 = vld [vmem:[#allocation5 + $0x190] sm:$0xff]
    %v92 = vld [vmem:[#allocation5 + $0x198] sm:$0xff]
    %v93 = vld [vmem:[#allocation5 + $0x1a0] sm:$0xff]
    %v94 = vld [vmem:[#allocation5 + $0x1a8] sm:$0xff]
    %v95 = vld [vmem:[#allocation5 + $0x1b0] sm:$0xff]
    %v96 = vld [vmem:[#allocation5 + $0x1b8] sm:$0xff]
    %v97 = vld [vmem:[#allocation5 + $0x1c0] sm:$0xff]
    %v98 = vld [vmem:[#allocation5 + $0x1c8] sm:$0xff]
    %v99 = vld [vmem:[#allocation5 + $0x1d0] sm:$0xff]
    %v100 = vld [vmem:[#allocation5 + $0x1d8] sm:$0xff]
    %v101 = vld [vmem:[#allocation5 + $0x1e0] sm:$0xff]
    %v102 = vld [vmem:[#allocation5 + $0x1e8] sm:$0xff]
    %v103 = vld [vmem:[#allocation5 + $0x1f0] sm:$0xff]
    %v104 = vld [vmem:[#allocation5 + $0x1f8] sm:$0xff]
    %v105 = vld [vmem:[#allocation5 + $0x200] sm:$0xff]
    %v106 = vld [vmem:[#allocation5 + $0x208] sm:$0xff]
    %v107 = vld [vmem:[#allocation5 + $0x210] sm:$0xff]
    %v108 = vld [vmem:[#allocation5 + $0x218] sm:$0xff]
    %v109 = vld [vmem:[#allocation5 + $0x220] sm:$0xff]
    %v110 = vld [vmem:[#allocation5 + $0x228] sm:$0xff]
    %v111 = vld [vmem:[#allocation5 + $0x230] sm:$0xff]
    %v112 = vld [vmem:[#allocation5 + $0x238] sm:$0xff]
    %v113 = vld [vmem:[#allocation5 + $0x240] sm:$0xff]
    %v114 = vld [vmem:[#allocation5 + $0x248] sm:$0xff]
    %v115 = vld [vmem:[#allocation5 + $0x250] sm:$0xff]
    %v116 = vld [vmem:[#allocation5 + $0x258] sm:$0xff]
    %v117 = vld [vmem:[#allocation5 + $0x260] sm:$0xff]
    %v118 = vld [vmem:[#allocation5 + $0x268] sm:$0xff]
    %v119 = vld [vmem:[#allocation5 + $0x270] sm:$0xff]
    %v120 = vld [vmem:[#allocation5 + $0x278] sm:$0xff]
    %v121 = vld [vmem:[#allocation5 + $0x280] sm:$0xff]
    %v122 = vld [vmem:[#allocation5 + $0x288] sm:$0xff]
    %v123 = vld [vmem:[#allocation5 + $0x290] sm:$0xff]
    %v124 = vld [vmem:[#allocation5 + $0x298] sm:$0xff]
    %v125 = vld [vmem:[#allocation5 + $0x2a0] sm:$0xff]
    %v126 = vld [vmem:[#allocation5 + $0x2a8] sm:$0xff]
    %v127 = vld [vmem:[#allocation5 + $0x2b0] sm:$0xff]
    %v128 = vld [vmem:[#allocation5 + $0x2b8] sm:$0xff]
    %v129 = vld [vmem:[#allocation5 + $0x2c0] sm:$0xff]
    %v130 = vld [vmem:[#allocation5 + $0x2c8] sm:$0xff]
    %v131 = vld [vmem:[#allocation5 + $0x2d0] sm:$0xff]
    %v132 = vld [vmem:[#allocation5 + $0x2d8] sm:$0xff]
    %v133 = vld [vmem:[#allocation5 + $0x2e0] sm:$0xff]
    %v134 = vld [vmem:[#allocation5 + $0x2e8] sm:$0xff]
    %v135 = vld [vmem:[#allocation5 + $0x2f0] sm:$0xff]
    %v136 = vld [vmem:[#allocation5 + $0x2f8] sm:$0xff]
    %v140 = vunpack.c.l.b16 %v38
    %v141 = vunpack.c.h.b16 %v38
    %v142 = vunpack.c.l.b16 %v39
    %v143 = vunpack.c.h.b16 %v39
    %v144 = vunpack.c.l.b16 %v40
    %v145 = vunpack.c.h.b16 %v40
    %v146 = vpack.c.b16 %v140, %v140
    %v147 = vpack.c.b16 %v141, %v141
    %v148 = vpack.c.b16 %v142, %v142
    %v149 = vpack.c.b16 %v143, %v143
    %v150 = vpack.c.b16 %v144, %v144
    %v151 = vpack.c.b16 %v145, %v145
    %v254 = vunpack.c.l.b16 %v41
    %v255 = vunpack.c.h.b16 %v41
    %v256 = vunpack.c.l.b16 %v42
    %v257 = vunpack.c.h.b16 %v42
    %v258 = vunpack.c.l.b16 %v43
    %v259 = vunpack.c.h.b16 %v43
    %v260 = vunpack.c.l.b16 %v44
    %v261 = vunpack.c.h.b16 %v44
    %v262 = vunpack.c.l.b16 %v45
    %v263 = vunpack.c.h.b16 %v45
    %v264 = vunpack.c.l.b16 %v46
    %v265 = vunpack.c.h.b16 %v46
    %v266 = vunpack.c.l.b16 %v47
    %v267 = vunpack.c.h.b16 %v47
    %v268 = vunpack.c.l.b16 %v48
    %v269 = vunpack.c.h.b16 %v48
    %v270 = vunpack.c.l.b16 %v49
    %v271 = vunpack.c.h.b16 %v49
    %v272 = vunpack.c.l.b16 %v50
    %v273 = vunpack.c.h.b16 %v50
    %v274 = vunpack.c.l.b16 %v51
    %v275 = vunpack.c.h.b16 %v51
    %v276 = vunpack.c.l.b16 %v52
    %v277 = vunpack.c.h.b16 %v52
    %v278 = vunpack.c.l.b16 %v53
    %v279 = vunpack.c.h.b16 %v53
    %v280 = vunpack.c.l.b16 %v54
    %v281 = vunpack.c.h.b16 %v54
    %v282 = vunpack.c.l.b16 %v55
    %v283 = vunpack.c.h.b16 %v55
    %v284 = vunpack.c.l.b16 %v56
    %v285 = vunpack.c.h.b16 %v56
    %v286 = vunpack.c.l.b16 %v57
    %v287 = vunpack.c.h.b16 %v57
    %v288 = vunpack.c.l.b16 %v58
    %v289 = vunpack.c.h.b16 %v58
    %v290 = vunpack.c.l.b16 %v59
    %v291 = vunpack.c.h.b16 %v59
    %v292 = vunpack.c.l.b16 %v60
    %v293 = vunpack.c.h.b16 %v60
    %v294 = vunpack.c.l.b16 %v61
    %v295 = vunpack.c.h.b16 %v61
    %v296 = vunpack.c.l.b16 %v62
    %v297 = vunpack.c.h.b16 %v62
    %v298 = vunpack.c.l.b16 %v63
    %v299 = vunpack.c.h.b16 %v63
    %v300 = vunpack.c.l.b16 %v64
    %v301 = vunpack.c.h.b16 %v64
    %v302 = vunpack.c.l.b16 %v65
    %v303 = vunpack.c.h.b16 %v65
    %v304 = vunpack.c.l.b16 %v66
    %v305 = vunpack.c.h.b16 %v66
    %v306 = vunpack.c.l.b16 %v67
    %v307 = vunpack.c.h.b16 %v67
    %v308 = vunpack.c.l.b16 %v68
    %v309 = vunpack.c.h.b16 %v68
    %v310 = vunpack.c.l.b16 %v69
    %v311 = vunpack.c.h.b16 %v69
    %v312 = vunpack.c.l.b16 %v70
    %v313 = vunpack.c.h.b16 %v70
    %v314 = vunpack.c.l.b16 %v71
    %v315 = vunpack.c.h.b16 %v71
    %v316 = vunpack.c.l.b16 %v72
    %v317 = vunpack.c.h.b16 %v72
    %v318 = vunpack.c.l.b16 %v73
    %v319 = vunpack.c.h.b16 %v73
    %v320 = vunpack.c.l.b16 %v74
    %v321 = vunpack.c.h.b16 %v74
    %v322 = vunpack.c.l.b16 %v75
    %v323 = vunpack.c.h.b16 %v75
    %v324 = vunpack.c.l.b16 %v76
    %v325 = vunpack.c.h.b16 %v76
    %v326 = vunpack.c.l.b16 %v77
    %v327 = vunpack.c.h.b16 %v77
    %v328 = vunpack.c.l.b16 %v78
    %v329 = vunpack.c.h.b16 %v78
    %v330 = vunpack.c.l.b16 %v79
    %v331 = vunpack.c.h.b16 %v79
    %v332 = vunpack.c.l.b16 %v80
    %v333 = vunpack.c.h.b16 %v80
    %v334 = vunpack.c.l.b16 %v81
    %v335 = vunpack.c.h.b16 %v81
    %v336 = vunpack.c.l.b16 %v82
    %v337 = vunpack.c.h.b16 %v82
    %v338 = vunpack.c.l.b16 %v83
    %v339 = vunpack.c.h.b16 %v83
    %v340 = vunpack.c.l.b16 %v84
    %v341 = vunpack.c.h.b16 %v84
    %v342 = vunpack.c.l.b16 %v85
    %v343 = vunpack.c.h.b16 %v85
    %v344 = vunpack.c.l.b16 %v86
    %v345 = vunpack.c.h.b16 %v86
    %v346 = vunpack.c.l.b16 %v87
    %v347 = vunpack.c.h.b16 %v87
    %v348 = vunpack.c.l.b16 %v88
    %v349 = vunpack.c.h.b16 %v88
    %v350 = vunpack.c.l.b16 %v89
    %v351 = vunpack.c.h.b16 %v89
    %v352 = vunpack.c.l.b16 %v90
    %v353 = vunpack.c.h.b16 %v90
    %v354 = vunpack.c.l.b16 %v91
    %v355 = vunpack.c.h.b16 %v91
    %v356 = vunpack.c.l.b16 %v92
    %v357 = vunpack.c.h.b16 %v92
    %v358 = vunpack.c.l.b16 %v93
    %v359 = vunpack.c.h.b16 %v93
    %v360 = vunpack.c.l.b16 %v94
    %v361 = vunpack.c.h.b16 %v94
    %v362 = vunpack.c.l.b16 %v95
    %v363 = vunpack.c.h.b16 %v95
    %v364 = vunpack.c.l.b16 %v96
    %v365 = vunpack.c.h.b16 %v96
    %v366 = vunpack.c.l.b16 %v97
    %v367 = vunpack.c.h.b16 %v97
    %v368 = vunpack.c.l.b16 %v98
    %v369 = vunpack.c.h.b16 %v98
    %v370 = vunpack.c.l.b16 %v99
    %v371 = vunpack.c.h.b16 %v99
    %v372 = vunpack.c.l.b16 %v100
    %v373 = vunpack.c.h.b16 %v100
    %v374 = vunpack.c.l.b16 %v101
    %v375 = vunpack.c.h.b16 %v101
    %v376 = vunpack.c.l.b16 %v102
    %v377 = vunpack.c.h.b16 %v102
    %v378 = vunpack.c.l.b16 %v103
    %v379 = vunpack.c.h.b16 %v103
    %v380 = vunpack.c.l.b16 %v104
    %v381 = vunpack.c.h.b16 %v104
    %v382 = vunpack.c.l.b16 %v105
    %v383 = vunpack.c.h.b16 %v105
    %v384 = vunpack.c.l.b16 %v106
    %v385 = vunpack.c.h.b16 %v106
    %v386 = vunpack.c.l.b16 %v107
    %v387 = vunpack.c.h.b16 %v107
    %v388 = vunpack.c.l.b16 %v108
    %v389 = vunpack.c.h.b16 %v108
    %v390 = vunpack.c.l.b16 %v109
    %v391 = vunpack.c.h.b16 %v109
    %v392 = vunpack.c.l.b16 %v110
    %v393 = vunpack.c.h.b16 %v110
    %v394 = vunpack.c.l.b16 %v111
    %v395 = vunpack.c.h.b16 %v111
    %v396 = vunpack.c.l.b16 %v112
    %v397 = vunpack.c.h.b16 %v112
    %v398 = vunpack.c.l.b16 %v113
    %v399 = vunpack.c.h.b16 %v113
    %v400 = vunpack.c.l.b16 %v114
    %v401 = vunpack.c.h.b16 %v114
    %v402 = vunpack.c.l.b16 %v115
    %v403 = vunpack.c.h.b16 %v115
    %v404 = vunpack.c.l.b16 %v116
    %v405 = vunpack.c.h.b16 %v116
    %v406 = vunpack.c.l.b16 %v117
    %v407 = vunpack.c.h.b16 %v117
    %v408 = vunpack.c.l.b16 %v118
    %v409 = vunpack.c.h.b16 %v118
    %v410 = vunpack.c.l.b16 %v119
    %v411 = vunpack.c.h.b16 %v119
    %v412 = vunpack.c.l.b16 %v120
    %v413 = vunpack.c.h.b16 %v120
    %v414 = vunpack.c.l.b16 %v121
    %v415 = vunpack.c.h.b16 %v121
    %v416 = vunpack.c.l.b16 %v122
    %v417 = vunpack.c.h.b16 %v122
    %v418 = vunpack.c.l.b16 %v123
    %v419 = vunpack.c.h.b16 %v123
    %v420 = vunpack.c.l.b16 %v124
    %v421 = vunpack.c.h.b16 %v124
    %v422 = vunpack.c.l.b16 %v125
    %v423 = vunpack.c.h.b16 %v125
    %v424 = vunpack.c.l.b16 %v126
    %v425 = vunpack.c.h.b16 %v126
    %v426 = vunpack.c.l.b16 %v127
    %v427 = vunpack.c.h.b16 %v127
    %v428 = vunpack.c.l.b16 %v128
    %v429 = vunpack.c.h.b16 %v128
    %v430 = vunpack.c.l.b16 %v129
    %v431 = vunpack.c.h.b16 %v129
    %v432 = vunpack.c.l.b16 %v130
    %v433 = vunpack.c.h.b16 %v130
    %v434 = vunpack.c.l.b16 %v131
    %v435 = vunpack.c.h.b16 %v131
    %v436 = vunpack.c.l.b16 %v132
    %v437 = vunpack.c.h.b16 %v132
    %v438 = vunpack.c.l.b16 %v133
    %v439 = vunpack.c.h.b16 %v133
    %v440 = vunpack.c.l.b16 %v134
    %v441 = vunpack.c.h.b16 %v134
    %v442 = vunpack.c.l.b16 %v135
    %v443 = vunpack.c.h.b16 %v135
    %v444 = vunpack.c.l.b16 %v136
    %v445 = vunpack.c.h.b16 %v136
    %v446 = vpack.c.b16 %v256, %v254
    %v447 = vpack.c.b16 %v257, %v255
    %v448 = vpack.c.b16 %v260, %v258
    %v449 = vpack.c.b16 %v261, %v259
    %v450 = vpack.c.b16 %v264, %v262
    %v451 = vpack.c.b16 %v265, %v263
    %v452 = vpack.c.b16 %v268, %v266
    %v453 = vpack.c.b16 %v269, %v267
    %v454 = vpack.c.b16 %v272, %v270
    %v455 = vpack.c.b16 %v273, %v271
    %v456 = vpack.c.b16 %v276, %v274
    %v457 = vpack.c.b16 %v277, %v275
    %v458 = vpack.c.b16 %v280, %v278
    %v459 = vpack.c.b16 %v281, %v279
    %v460 = vpack.c.b16 %v284, %v282
    %v461 = vpack.c.b16 %v285, %v283
    %v462 = vpack.c.b16 %v288, %v286
    %v463 = vpack.c.b16 %v289, %v287
    %v464 = vpack.c.b16 %v292, %v290
    %v465 = vpack.c.b16 %v293, %v291
    %v466 = vpack.c.b16 %v296, %v294
    %v467 = vpack.c.b16 %v297, %v295
    %v468 = vpack.c.b16 %v300, %v298
    %v469 = vpack.c.b16 %v301, %v299
    %v470 = vpack.c.b16 %v304, %v302
    %v471 = vpack.c.b16 %v305, %v303
    %v472 = vpack.c.b16 %v308, %v306
    %v473 = vpack.c.b16 %v309, %v307
    %v474 = vpack.c.b16 %v312, %v310
    %v475 = vpack.c.b16 %v313, %v311
    %v476 = vpack.c.b16 %v316, %v314
    %v477 = vpack.c.b16 %v317, %v315
    %v478 = vpack.c.b16 %v320, %v318
    %v479 = vpack.c.b16 %v321, %v319
    %v480 = vpack.c.b16 %v324, %v322
    %v481 = vpack.c.b16 %v325, %v323
    %v482 = vpack.c.b16 %v328, %v326
    %v483 = vpack.c.b16 %v329, %v327
    %v484 = vpack.c.b16 %v332, %v330
    %v485 = vpack.c.b16 %v333, %v331
    %v486 = vpack.c.b16 %v336, %v334
    %v487 = vpack.c.b16 %v337, %v335
    %v488 = vpack.c.b16 %v340, %v338
    %v489 = vpack.c.b16 %v341, %v339
    %v490 = vpack.c.b16 %v344, %v342
    %v491 = vpack.c.b16 %v345, %v343
    %v492 = vpack.c.b16 %v348, %v346
    %v493 = vpack.c.b16 %v349, %v347
    %v494 = vpack.c.b16 %v352, %v350
    %v495 = vpack.c.b16 %v353, %v351
    %v496 = vpack.c.b16 %v356, %v354
    %v497 = vpack.c.b16 %v357, %v355
    %v498 = vpack.c.b16 %v360, %v358
    %v499 = vpack.c.b16 %v361, %v359
    %v500 = vpack.c.b16 %v364, %v362
    %v501 = vpack.c.b16 %v365, %v363
    %v502 = vpack.c.b16 %v368, %v366
    %v503 = vpack.c.b16 %v369, %v367
    %v504 = vpack.c.b16 %v372, %v370
    %v505 = vpack.c.b16 %v373, %v371
    %v506 = vpack.c.b16 %v376, %v374
    %v507 = vpack.c.b16 %v377, %v375
    %v508 = vpack.c.b16 %v380, %v378
    %v509 = vpack.c.b16 %v381, %v379
    %v510 = vpack.c.b16 %v384, %v382
    %v511 = vpack.c.b16 %v385, %v383
    %v512 = vpack.c.b16 %v388, %v386
    %v513 = vpack.c.b16 %v389, %v387
    %v514 = vpack.c.b16 %v392, %v390
    %v515 = vpack.c.b16 %v393, %v391
    %v516 = vpack.c.b16 %v396, %v394
    %v517 = vpack.c.b16 %v397, %v395
    %v518 = vpack.c.b16 %v400, %v398
    %v519 = vpack.c.b16 %v401, %v399
    %v520 = vpack.c.b16 %v404, %v402
    %v521 = vpack.c.b16 %v405, %v403
    %v522 = vpack.c.b16 %v408, %v406
    %v523 = vpack.c.b16 %v409, %v407
    %v524 = vpack.c.b16 %v412, %v410
    %v525 = vpack.c.b16 %v413, %v411
    %v526 = vpack.c.b16 %v416, %v414
    %v527 = vpack.c.b16 %v417, %v415
    %v528 = vpack.c.b16 %v420, %v418
    %v529 = vpack.c.b16 %v421, %v419
    %v530 = vpack.c.b16 %v424, %v422
    %v531 = vpack.c.b16 %v425, %v423
    %v532 = vpack.c.b16 %v428, %v426
    %v533 = vpack.c.b16 %v429, %v427
    %v534 = vpack.c.b16 %v432, %v430
    %v535 = vpack.c.b16 %v433, %v431
    %v536 = vpack.c.b16 %v436, %v434
    %v537 = vpack.c.b16 %v437, %v435
    %v538 = vpack.c.b16 %v440, %v438
    %v539 = vpack.c.b16 %v441, %v439
    %v540 = vpack.c.b16 %v444, %v442
    %v541 = vpack.c.b16 %v445, %v443
    %638 = vmatprep.subr.bf16.mxu0 %v447
    %639 = vmatpush1.bf16.msra.mxu0 %v446
    %640 = vmatprep.subr.bf16.mxu0 %v449
    %641 = vmatpush1.bf16.msra.mxu0 %v448
    %642 = vmatprep.subr.bf16.mxu0 %v451
    %643 = vmatpush1.bf16.msra.mxu0 %v450
    %644 = vmatprep.subr.bf16.mxu0 %v453
    %645 = vmatpush1.bf16.msra.mxu0 %v452
    %646 = vmatprep.subr.bf16.mxu0 %v455
    %647 = vmatpush1.bf16.msra.mxu0 %v454
    %648 = vmatprep.subr.bf16.mxu0 %v457
    %649 = vmatpush1.bf16.msra.mxu0 %v456
    %650 = vmatprep.subr.bf16.mxu0 %v459
    %651 = vmatpush1.bf16.msra.mxu0 %v458
    %652 = vmatprep.subr.bf16.mxu0 %v461
    %653 = vmatpush1.bf16.msra.mxu0 %v460
    %654 = vmatprep.subr.bf16.mxu0 %v463
    %655 = vmatpush1.bf16.msra.mxu0 %v462
    %656 = vmatprep.subr.bf16.mxu0 %v465
    %657 = vmatpush1.bf16.msra.mxu0 %v464
    %658 = vmatprep.subr.bf16.mxu0 %v467
    %659 = vmatpush1.bf16.msra.mxu0 %v466
    %660 = vmatprep.subr.bf16.mxu0 %v469
    %661 = vmatpush1.bf16.msra.mxu0 %v468
    %662 = vmatprep.subr.bf16.mxu0 %v471
    %663 = vmatpush1.bf16.msra.mxu0 %v470
    %664 = vmatprep.subr.bf16.mxu0 %v473
    %665 = vmatpush1.bf16.msra.mxu0 %v472
    %666 = vmatprep.subr.bf16.mxu0 %v475
    %667 = vmatpush1.bf16.msra.mxu0 %v474
    %668 = vmatprep.subr.bf16.mxu0 %v477
    %669 = vmatpush1.bf16.msra.mxu0 %v476
    %670 = vmatprep.mubr.bf16.mxu0 %v147
    %671 = vmatmul.mubr.bf16.gmra.mrb[0].mxu0 %v146
    %v672 = vpop.f32.mrb[0].mxu0
    %v673 = vadd.f32 0.0, %v672
    %v674 = vpop.f32.mrb[0].mxu0
    %v675 = vadd.f32 0.0, %v674
    %v676 = vpop.f32.mrb[0].mxu0
    %v677 = vpop.f32.mrb[0].mxu0
    %678 = vdwg.mxu0
    %679 = vmatprep.subr.bf16.mxu0 %v479
    %680 = vmatpush1.bf16.msra.mxu0 %v478
    %681 = vmatprep.subr.bf16.mxu0 %v481
    %682 = vmatpush1.bf16.msra.mxu0 %v480
    %683 = vmatprep.subr.bf16.mxu0 %v483
    %684 = vmatpush1.bf16.msra.mxu0 %v482
    %685 = vmatprep.subr.bf16.mxu0 %v485
    %686 = vmatpush1.bf16.msra.mxu0 %v484
    %687 = vmatprep.subr.bf16.mxu0 %v487
    %688 = vmatpush1.bf16.msra.mxu0 %v486
    %689 = vmatprep.subr.bf16.mxu0 %v489
    %690 = vmatpush1.bf16.msra.mxu0 %v488
    %691 = vmatprep.subr.bf16.mxu0 %v491
    %692 = vmatpush1.bf16.msra.mxu0 %v490
    %693 = vmatprep.subr.bf16.mxu0 %v493
    %694 = vmatpush1.bf16.msra.mxu0 %v492
    %695 = vmatprep.subr.bf16.mxu0 %v495
    %696 = vmatpush1.bf16.msra.mxu0 %v494
    %697 = vmatprep.subr.bf16.mxu0 %v497
    %698 = vmatpush1.bf16.msra.mxu0 %v496
    %699 = vmatprep.subr.bf16.mxu0 %v499
    %700 = vmatpush1.bf16.msra.mxu0 %v498
    %701 = vmatprep.subr.bf16.mxu0 %v501
    %702 = vmatpush1.bf16.msra.mxu0 %v500
    %703 = vmatprep.subr.bf16.mxu0 %v503
    %704 = vmatpush1.bf16.msra.mxu0 %v502
    %705 = vmatprep.subr.bf16.mxu0 %v505
    %706 = vmatpush1.bf16.msra.mxu0 %v504
    %707 = vmatprep.subr.bf16.mxu0 %v507
    %708 = vmatpush1.bf16.msra.mxu0 %v506
    %709 = vmatprep.subr.bf16.mxu0 %v509
    %710 = vmatpush1.bf16.msra.mxu0 %v508
    %711 = vmatprep.mubr.bf16.mxu0 %v149
    %712 = vmatmul.mubr.bf16.gmra.mrb[0].mxu0 %v148
    %v713 = vpop.f32.mrb[0].mxu0
    %v714 = vadd.f32 %v673, %v713
    %v715 = vpop.f32.mrb[0].mxu0
    %v716 = vadd.f32 %v675, %v715
    %v717 = vpop.f32.mrb[0].mxu0
    %v718 = vpop.f32.mrb[0].mxu0
    %719 = vdwg.mxu0
    %720 = vmatprep.subr.bf16.mxu0 %v511
    %721 = vmatpush1.bf16.msra.mxu0 %v510
    %722 = vmatprep.subr.bf16.mxu0 %v513
    %723 = vmatpush1.bf16.msra.mxu0 %v512
    %724 = vmatprep.subr.bf16.mxu0 %v515
    %725 = vmatpush1.bf16.msra.mxu0 %v514
    %726 = vmatprep.subr.bf16.mxu0 %v517
    %727 = vmatpush1.bf16.msra.mxu0 %v516
    %728 = vmatprep.subr.bf16.mxu0 %v519
    %729 = vmatpush1.bf16.msra.mxu0 %v518
    %730 = vmatprep.subr.bf16.mxu0 %v521
    %731 = vmatpush1.bf16.msra.mxu0 %v520
    %732 = vmatprep.subr.bf16.mxu0 %v523
    %733 = vmatpush1.bf16.msra.mxu0 %v522
    %734 = vmatprep.subr.bf16.mxu0 %v525
    %735 = vmatpush1.bf16.msra.mxu0 %v524
    %736 = vmatprep.subr.bf16.mxu0 %v527
    %737 = vmatpush1.bf16.msra.mxu0 %v526
    %738 = vmatprep.subr.bf16.mxu0 %v529
    %739 = vmatpush1.bf16.msra.mxu0 %v528
    %740 = vmatprep.subr.bf16.mxu0 %v531
    %741 = vmatpush1.bf16.msra.mxu0 %v530
    %742 = vmatprep.subr.bf16.mxu0 %v533
    %743 = vmatpush1.bf16.msra.mxu0 %v532
    %744 = vmatprep.subr.bf16.mxu0 %v535
    %745 = vmatpush1.bf16.msra.mxu0 %v534
    %746 = vmatprep.subr.bf16.mxu0 %v537
    %747 = vmatpush1.bf16.msra.mxu0 %v536
    %748 = vmatprep.subr.bf16.mxu0 %v539
    %749 = vmatpush1.bf16.msra.mxu0 %v538
    %750 = vmatprep.subr.bf16.mxu0 %v541
    %751 = vmatpush1.bf16.msra.mxu0 %v540
    %752 = vmatprep.mubr.bf16.mxu0 %v151
    %753 = vmatmul.mubr.bf16.gmra.mrb[0].mxu0 %v150
    %v754 = vpop.f32.mrb[0].mxu0
    %v755 = vadd.f32 %v714, %v754
    %v756 = vpop.f32.mrb[0].mxu0
    %v757 = vadd.f32 %v716, %v756
    %v758 = vpop.f32.mrb[0].mxu0
    %v759 = vpop.f32.mrb[0].mxu0
    %760 = vdwg.mxu0
    %v761 = vpack.c.bf16 %v755, %v755
    %v762 = vpack.c.bf16 %v757, %v757
    %v765 = vunpack.c.l.b16 %v761
    %v766 = vunpack.c.l.b16 %v762
    %v767 = vpack.c.b16 %v766, %v765
    %769 = vst [vmem:[#allocation7] sm:$0xff] %v767
    // Predicated region
    $region18: #{tpu_custom_call.1} parent=1 // pred_check
      _
    $region19: #{tpu_custom_call.1} parent=1 // pred_check_branch
      %771 = sbr.rel (0) target = $region21
    $region20: #{tpu_custom_call.1} parent=1 // pred_region
      %s773 = ssub.s32 128, 128
      %774 = vsyncadd [#allocation4], %s773
      %s776 = sshll.u32 [#allocation7], 4
      %s777 = int_to_ptr.vmem [resolvable:$true] %s776
      %779 = dma.vmem_to_hbm [thread:$0]  %s777, 128, %s2, [#allocation4]
    $region21: #{tpu_custom_call.1} parent=1 // pred_fallthru
      _
    // Predicated region
    $region22: #{tpu_custom_call.1} parent=1 // pred_check
      _
    $region23: #{tpu_custom_call.1} parent=1 // pred_check_branch
      %781 = sbr.rel (0) target = $region25
    $region24: #{tpu_custom_call.1} parent=1 // pred_region
      %782 = dma.done [#allocation4], 128
    $region25: #{tpu_custom_call.1} parent=1 // pred_fallthru
      _
    %783 = vsyncpa [#allocation3], 1
    %784 = vsyncpa [#allocation6], 1
    %785 = vsyncpa [#allocation4], 1

</llo_original>
